<compile_context>
chip_gen: v5e
topology: v5e:2x2
jax: 0.10.0
libtpu: 0.0.40
codegen_flags: <defaults>
</compile_context>

<pallas_src>
import jax
import jax.numpy as jnp
from jax.experimental import pallas as pl
from jax.experimental.pallas import tpu as pltpu


def _linear_sigmoid_slab_kernel(w_ref, b_ref, x_ref, o_ref):
    # w_ref: SMEM (3,)          f32 -- Linear weight, one scalar per feature
    # b_ref: SMEM (1,)          f32 -- Linear bias
    # x_ref: VMEM (3, TM, 128)  f32 -- batch fills sublanes and lanes (dense)
    # o_ref: VMEM (TM, 128)     f32 -- dense output slab -> unmasked vst
    z = (x_ref[0] * w_ref[0]
         + x_ref[1] * w_ref[1]
         + x_ref[2] * w_ref[2]
         + b_ref[0])
    # sigmoid(z) == 0.5 * (1 + tanh(z / 2)): exact, single EUP op per element,
    # co-issues with the vector load/store slots (kernel stays DMA-bound).
    o_ref[...] = 0.5 * (1.0 + jnp.tanh(0.5 * z))


def linear_sigmoid_slab(x_slab, weight, bias, *, block_rows=4096):
    """Core Pallas call: x_slab (3, M, 128) f32 -> (M, 128) f32.

    block_rows: slab rows (each = 128 batch elements) per grid step, must be a
    multiple of 8.  Default 4096 -> 512K elements / step (~16 MiB of
    double-buffered VMEM, well above the ~0.35 us per-step overhead on every
    generation).  Raise on v7x/v6e (and vmem_limit_bytes with it) if desired,
    but keep >=2 grid tiles so the "parallel" axis can megacore-shard.
    """
    _, m, lanes = x_slab.shape
    assert lanes == 128
    assert block_rows % 8 == 0
    # Block second-to-last dim must be a multiple of 8 or the full extent.
    tm = m if m <= block_rows else block_rows
    grid = (pl.cdiv(m, tm),)  # ragged final block handled by Pallas (no pad)
    n_elems = m * 128

    return pl.pallas_call(
        _linear_sigmoid_slab_kernel,
        out_shape=jax.ShapeDtypeStruct((m, 128), jnp.float32),
        grid=grid,
        in_specs=[
            # weight / bias: tiny 32-bit scalars, resident in SMEM.
            pl.BlockSpec(memory_space=pltpu.MemorySpace.SMEM),
            pl.BlockSpec(memory_space=pltpu.MemorySpace.SMEM),
            # x: dense (3, TM, 128) slabs, auto double-buffered by BlockSpec.
            pl.BlockSpec((3, tm, 128), lambda i: (0, i, 0)),
        ],
        out_specs=pl.BlockSpec((tm, 128), lambda i: (i, 0)),
        compiler_params=pltpu.CompilerParams(
            dimension_semantics=("parallel",),   # independent batch tiles
            vmem_limit_bytes=32 * 1024 * 1024,   # covers default tm on v5e too
        ),
        cost_estimate=pl.CostEstimate(
            flops=8 * n_elems,           # 3 mul + 3 add + ~2 for sigmoid affine
            transcendentals=n_elems,     # one tanh per element
            bytes_accessed=16 * n_elems, # 12 B in + 4 B out per element
        ),
    )(weight.reshape(3).astype(jnp.float32),
      bias.reshape(1).astype(jnp.float32),
      x_slab.astype(jnp.float32))


def custom_model_forward_feature_major(x_fm, weight, bias, *, block_rows=4096):
    """Fast path: activation already feature-major, x_fm: (3, N) -> y: (N, 1).

    When N % 128 == 0 (recommended) there is NO wrapper-side data movement:
    the (3, N) -> (3, N//128, 128) reshape is a free row-major view, so
    end-to-end HBM traffic is ~16 bytes per batch element.
    """
    _, n = x_fm.shape
    n_pad = pl.cdiv(n, 128) * 128
    if n_pad != n:
        # <=127 columns of pad, only when the caller hands a non-128-multiple.
        x_fm = jnp.pad(x_fm, ((0, 0), (0, n_pad - n)))
    x_slab = x_fm.reshape(3, n_pad // 128, 128)
    y_slab = linear_sigmoid_slab(x_slab, weight, bias, block_rows=block_rows)
    return y_slab.reshape(n_pad)[:n].reshape(n, 1)


def custom_model_forward(x, weight, bias, *, block_rows=4096):
    """PyTorch-layout entry matching CustomModel.forward: x [N, 3] -> y [N, 1].

    Pays exactly one XLA layout copy (row-major -> feature-major); callers
    that can produce the activation feature-major should use
    custom_model_forward_feature_major instead.
    """
    # TODO(synk): fuse this transpose into the producer of x (emit the
    # activation feature-major upstream) instead of a standalone XLA copy.
    return custom_model_forward_feature_major(
        x.T, weight, bias, block_rows=block_rows)


if __name__ == "__main__":
    key = jax.random.PRNGKey(0)
    kx, kw, kb, kx2, kx3 = jax.random.split(key, 5)

    # Deterministic synthetic parameters matching nn.Linear(3, 1)
    weight = jax.random.normal(kw, (1, 3), dtype=jnp.float32) * 0.5
    bias = jax.random.normal(kb, (1,), dtype=jnp.float32) * 0.1

    # 1) Module-compatible path, tiny batch (like the original demo).
    batch = 8
    x = jax.random.normal(kx, (batch, 3), dtype=jnp.float32)
    y = jax.block_until_ready(custom_model_forward(x, weight, bias))
    y_ref = jax.nn.sigmoid(x @ weight.T + bias)
    assert y.shape == (batch, 1)
    assert jnp.allclose(y, y_ref, atol=1e-4), "mismatch vs reference (small)"

    # 2) Multi-tile + ragged final block: M = 10 slab rows, TM = 8 -> grid = 2.
    batch2 = 1200
    x2 = jax.random.normal(kx2, (batch2, 3), dtype=jnp.float32)
    y2 = jax.block_until_ready(
        custom_model_forward(x2, weight, bias, block_rows=8))
    y2_ref = jax.nn.sigmoid(x2 @ weight.T + bias)
    assert y2.shape == (batch2, 1)
    assert jnp.allclose(y2, y2_ref, atol=1e-4), "mismatch vs reference (ragged)"

    # 3) Feature-major fast path: no wrapper transpose/pad, N % 128 == 0.
    batch3 = 2048
    x3_fm = jax.random.normal(kx3, (3, batch3), dtype=jnp.float32)
    y3 = jax.block_until_ready(
        custom_model_forward_feature_major(x3_fm, weight, bias, block_rows=8))
    y3_ref = jax.nn.sigmoid(x3_fm.T @ weight.T + bias)
    assert y3.shape == (batch3, 1)
    assert jnp.allclose(y3, y3_ref, atol=1e-4), "mismatch vs reference (fm)"

    print("KERNEL_OK")
</pallas_src>

<mosaic_0001>
module attributes {stable_mosaic.version = 11 : i64} {
  func.func @_linear_sigmoid_slab_kernel(%arg0: i32, %arg1: memref<3xf32, #tpu.memory_space<smem>>, %arg2: memref<1xf32, #tpu.memory_space<smem>>, %arg3: memref<3x1x128xf32, #tpu.memory_space<vmem>>, %arg4: memref<1x128xf32, #tpu.memory_space<vmem>>) attributes {dimension_semantics = [#tpu.dimension_semantics<parallel>], iteration_bounds = array<i64: 1>, scalar_prefetch = 0 : i64, scratch_operands = 0 : i64, tpu.core_type = #tpu.core_type<tc>, window_params = [{transform_indices = @transform_0, window_bounds = array<i64: 3>}, {transform_indices = @transform_1, window_bounds = array<i64: 1>}, {transform_indices = @transform_2, window_bounds = array<i64: 3, 1, 128>}, {transform_indices = @transform_3, window_bounds = array<i64: 1, 128>}]} {
    %c0 = arith.constant 0 : index
    %c0_0 = arith.constant 0 : index
    %c0_1 = arith.constant 0 : index
    %0 = vector.load %arg3[%c0, %c0_0, %c0_1] : memref<3x1x128xf32, #tpu.memory_space<vmem>>, vector<1x1x128xf32>
    %1 = vector.shape_cast %0 : vector<1x1x128xf32> to vector<1x128xf32>
    %c0_2 = arith.constant 0 : index
    %2 = memref.load %arg1[%c0_2] : memref<3xf32, #tpu.memory_space<smem>>
    %3 = vector.broadcast %2 : f32 to vector<1x128xf32>
    %4 = arith.mulf %1, %3 : vector<1x128xf32>
    %c1 = arith.constant 1 : index
    %c0_3 = arith.constant 0 : index
    %c0_4 = arith.constant 0 : index
    %5 = vector.load %arg3[%c1, %c0_3, %c0_4] : memref<3x1x128xf32, #tpu.memory_space<vmem>>, vector<1x1x128xf32>
    %6 = vector.shape_cast %5 : vector<1x1x128xf32> to vector<1x128xf32>
    %c1_5 = arith.constant 1 : index
    %7 = memref.load %arg1[%c1_5] : memref<3xf32, #tpu.memory_space<smem>>
    %8 = vector.broadcast %7 : f32 to vector<1x128xf32>
    %9 = arith.mulf %6, %8 : vector<1x128xf32>
    %10 = arith.addf %4, %9 : vector<1x128xf32>
    %c2 = arith.constant 2 : index
    %c0_6 = arith.constant 0 : index
    %c0_7 = arith.constant 0 : index
    %11 = vector.load %arg3[%c2, %c0_6, %c0_7] : memref<3x1x128xf32, #tpu.memory_space<vmem>>, vector<1x1x128xf32>
    %12 = vector.shape_cast %11 : vector<1x1x128xf32> to vector<1x128xf32>
    %c2_8 = arith.constant 2 : index
    %13 = memref.load %arg1[%c2_8] : memref<3xf32, #tpu.memory_space<smem>>
    %14 = vector.broadcast %13 : f32 to vector<1x128xf32>
    %15 = arith.mulf %12, %14 : vector<1x128xf32>
    %16 = arith.addf %10, %15 : vector<1x128xf32>
    %c0_9 = arith.constant 0 : index
    %17 = memref.load %arg2[%c0_9] : memref<1xf32, #tpu.memory_space<smem>>
    %18 = vector.broadcast %17 : f32 to vector<1x128xf32>
    %19 = arith.addf %16, %18 : vector<1x128xf32>
    %cst = arith.constant 5.000000e-01 : f32
    %20 = vector.broadcast %cst : f32 to vector<1x128xf32>
    %21 = arith.mulf %20, %19 : vector<1x128xf32>
    %22 = math.tanh %21 : vector<1x128xf32>
    %cst_10 = arith.constant 1.000000e+00 : f32
    %23 = vector.broadcast %cst_10 : f32 to vector<1x128xf32>
    %24 = arith.addf %23, %22 : vector<1x128xf32>
    %cst_11 = arith.constant 5.000000e-01 : f32
    %25 = vector.broadcast %cst_11 : f32 to vector<1x128xf32>
    %26 = arith.mulf %25, %24 : vector<1x128xf32>
    %c0_12 = arith.constant 0 : index
    %c0_13 = arith.constant 0 : index
    %27 = vector.load %arg4[%c0_12, %c0_13] : memref<1x128xf32, #tpu.memory_space<vmem>>, vector<1x128xf32>
    tpu.vector_store %arg4[%c0_12, %c0_13], %26 {strides = array<i32>} : memref<1x128xf32, #tpu.memory_space<vmem>>, vector<1x128xf32>,
    return
  }
  func.func @transform_0(%arg0: i32) -> i32 {
    %c0_i32 = arith.constant 0 : i32
    %c0_i32_0 = arith.constant 0 : i32
    return %c0_i32 : i32
  }
  func.func @transform_1(%arg0: i32) -> i32 {
    %c0_i32 = arith.constant 0 : i32
    %c0_i32_0 = arith.constant 0 : i32
    return %c0_i32 : i32
  }
  func.func @transform_2(%arg0: i32) -> (i32, i32, i32) {
    %c0_i32 = arith.constant 0 : i32
    %c0_i32_0 = arith.constant 0 : i32
    %c0_i32_1 = arith.constant 0 : i32
    return %c0_i32, %arg0, %c0_i32_0 : i32, i32, i32
  }
  func.func @transform_3(%arg0: i32) -> (i32, i32) {
    %c0_i32 = arith.constant 0 : i32
    %c0_i32_0 = arith.constant 0 : i32
    return %arg0, %c0_i32 : i32, i32
  }
}

</mosaic_0001>

<llo_original>
// kernel: tpu_custom_call.1
$region0: #{tpu_custom_call.1}
  #allocation0 [shape = 'u32[]', space=smem, size = 0x4, offset = 0x4, fixed_abs, tag = 'smem constant byte address 0x4 - core index']
  #allocation1 [shape = 'u32[72,128]{1,0:T(1,128)}', space=vmem, size = 0x9000, scoped, tag = 'internal scratch']
  #allocation2 [shape = 'f32[1]{0:T(128)S(6)}', space=smem, size = 0x200, scoped, tag = 'scoped memory for tpu_custom_call.1']
  %s0 = inlined_call_operand.vmem [shape: f32[3], index: 0, kind: input, shape index: {}]
  %s1 = inlined_call_operand.<no memory space> [shape: f32[1], index: 1, kind: input, shape index: {}]
  %s2 = inlined_call_operand.hbm [shape: f32[3,1,128], index: 2, kind: input, shape index: {}]
  %s3 = inlined_call_operand.hbm [shape: f32[1,128], index: 3, kind: output, shape index: {}]
  %s4 = sld [smem:[#allocation0]]
  $region30: #{tpu_custom_call.1} parent=0
    _
  %s6 = ssub.s32 1, %s4
  %s7 = scalar_select 0, %s6, %s4
  %8 = sst [smem:[#allocation2]] %s1
  $region1: #{tpu_custom_call.1} parent=0
    #allocation3 [shape = 'u8[512]{0}', space=smem, size = 0x200, scoped, tag = 'input window, operand 0, single buffered']
    #allocation4 [shape = 's32[1]{0}', space=sflag, size = 0x4, scoped, tag = 'scoped memory for tpu_custom_call.1']
    #allocation5 [shape = 's32[1]{0}', space=sflag, size = 0x4, scoped, tag = 'scoped memory for tpu_custom_call.1']
    #allocation6 [shape = 's32[1]{0}', space=sflag, size = 0x4, scoped, tag = 'scoped memory for tpu_custom_call.1']
    #allocation7 [shape = 'u8[1536]{0}', space=vmem, size = 0x800, scoped, tag = 'input window, operand 2, single buffered']
    #allocation8 [shape = 'u8[512]{0}', space=vmem, size = 0x400, scoped, tag = 'output window, operand 0, single buffered']
    %9 = vsyncpa [#allocation6], 0
    %10 = vsyncpa [#allocation4], 0
    %11 = vsyncpa [#allocation5], 0
    // Predicated region
    $region2: #{tpu_custom_call.1} parent=1 // pred_check
      _
    $region3: #{tpu_custom_call.1} parent=1 // pred_check_branch
      %13 = sbr.rel (0) target = $region5
    $region4: #{tpu_custom_call.1} parent=1 // pred_region
      %15 = vsyncadd [#allocation6], 0
      %s17 = sshll.u32 %s0, 4
      %s18 = int_to_ptr.vmem [resolvable:$true] %s17
      %20 = dma.vmem_to_smem %s18, 16, [#allocation3], [#allocation6]
    $region5: #{tpu_custom_call.1} parent=1 // pred_fallthru
      _
    // Predicated region
    $region6: #{tpu_custom_call.1} parent=1 // pred_check
      _
    $region7: #{tpu_custom_call.1} parent=1 // pred_check_branch
      %22 = sbr.rel (0) target = $region9
    $region8: #{tpu_custom_call.1} parent=1 // pred_region
      _
    $region9: #{tpu_custom_call.1} parent=1 // pred_fallthru
      _
    // Predicated region
    $region10: #{tpu_custom_call.1} parent=1 // pred_check
      _
    $region11: #{tpu_custom_call.1} parent=1 // pred_check_branch
      %24 = sbr.rel (0) target = $region13
    $region12: #{tpu_custom_call.1} parent=1 // pred_region
      %26 = vsyncadd [#allocation4], 0
      %s27 = sshll.u32 %s2, 4
      %s28 = int_to_ptr.hbm [resolvable:$true] %s27
      %s29 = sshll.u32 [#allocation7], 4
      %s30 = int_to_ptr.vmem [resolvable:$true] %s29
      %35 = dma.hbm_to_vmem [thread:$0]  %s28, 48, %s30, [#allocation4], 16, 16, 1
    $region13: #{tpu_custom_call.1} parent=1 // pred_fallthru
      _
    // Predicated region
    $region14: #{tpu_custom_call.1} parent=1 // pred_check
      _
    $region15: #{tpu_custom_call.1} parent=1 // pred_check_branch
      %37 = sbr.rel (0) target = $region17
    $region16: #{tpu_custom_call.1} parent=1 // pred_region
      %39 = dma.done [#allocation6], 16
    $region17: #{tpu_custom_call.1} parent=1 // pred_fallthru
      _
    // Predicated region
    $region18: #{tpu_custom_call.1} parent=1 // pred_check
      _
    $region19: #{tpu_custom_call.1} parent=1 // pred_check_branch
      %41 = sbr.rel (0) target = $region21
    $region20: #{tpu_custom_call.1} parent=1 // pred_region
      %43 = dma.done [#allocation4], 48
    $region21: #{tpu_custom_call.1} parent=1 // pred_fallthru
      _
    %44 = sfence
    %v45 = vld [vmem:[#allocation7] sm:$0x1]
    %s46 = sld [smem:[#allocation3]]
    %v47 = vstv %s46
    %v48 = vmul.f32 %v45, %v47
    %s49 = scalar_lea.vmem [#allocation7], 1
    %v50 = vld [vmem:[%s49] sm:$0x1]
    %s51 = sld [smem:[#allocation3 + $0x1]]
    %v52 = vstv %s51
    %v53 = vmul.f32 %v50, %v52
    %v54 = vadd.f32 %v48, %v53
    %s55 = scalar_lea.vmem [#allocation7], 2
    %v56 = vld [vmem:[%s55] sm:$0x1]
    %s57 = sld [smem:[#allocation3 + $0x2]]
    %v58 = vstv %s57
    %v59 = vmul.f32 %v56, %v58
    %v60 = vadd.f32 %v54, %v59
    %s61 = sld [smem:[#allocation2]]
    %v62 = vstv %s61
    %v63 = vadd.f32 %v60, %v62
    %v64 = vmul.f32 %v63, 0.5
    %v65 = vtanh.pop %v64
    %v66 = vadd.f32 %v65, 1.0
    %v67 = vmul.f32 %v66, 0.5
    %68 = vst [vmem:[#allocation8] sm:$0x1] %v67
    // Predicated region
    $region22: #{tpu_custom_call.1} parent=1 // pred_check
      _
    $region23: #{tpu_custom_call.1} parent=1 // pred_check_branch
      %70 = sbr.rel (0) target = $region25
    $region24: #{tpu_custom_call.1} parent=1 // pred_region
      %72 = vsyncadd [#allocation5], 0
      %s74 = sshll.u32 [#allocation8], 4
      %s75 = int_to_ptr.vmem [resolvable:$true] %s74
      %s76 = sshll.u32 %s3, 4
      %s77 = int_to_ptr.hbm [resolvable:$true] %s76
      %79 = dma.vmem_to_hbm [thread:$0]  %s75, 16, %s77, [#allocation5]
    $region25: #{tpu_custom_call.1} parent=1 // pred_fallthru
      _
    // Predicated region
    $region26: #{tpu_custom_call.1} parent=1 // pred_check
      _
    $region27: #{tpu_custom_call.1} parent=1 // pred_check_branch
      %81 = sbr.rel (0) target = $region29
    $region28: #{tpu_custom_call.1} parent=1 // pred_region
      %83 = dma.done [#allocation5], 16
    $region29: #{tpu_custom_call.1} parent=1 // pred_fallthru
      _
    %84 = vsyncpa [#allocation4], 1
    %85 = vsyncpa [#allocation5], 1
    %86 = vsyncpa [#allocation6], 1

</llo_original>
